<compile_context>
chip_gen: v7x
topology: tpu7x:2x2x1
jax: 0.10.0
libtpu: 0.0.40
codegen_flags: <defaults>
</compile_context>

<pallas_src>
import jax
import jax.numpy as jnp
from jax.experimental import pallas as pl
from jax.experimental.pallas import tpu as pltpu

_LANES = 128
# Per-block byte budget for one x tile. Double-buffered x + out tiles stay
# ~4x this figure (16 MiB), which we cover with an explicit vmem_limit_bytes.
_MAX_BLOCK_BYTES = 4 * 1024 * 1024
_VMEM_LIMIT_BYTES = 32 * 1024 * 1024


def _bias_kernel(x_ref, scale_ref, offset_ref, o_ref):
    # x_ref:      (tb, tc) in VMEM
    # scale_ref:  (1,  tc) in VMEM  (broadcasts over rows)
    # offset_ref: (1,  tc) in VMEM
    o_ref[...] = x_ref[...] * scale_ref[...] + offset_ref[...]


def make_bias_scale_offset(clss, num_classes, alpha, beta):
    """Precompute per-column scale/offset rows (hoisted out of the per-call path).

    Returns (scale, offset), each of shape (1, num_classes), float32.
    Columns in `clss` get (alpha, beta); all others get (1, 0).
    """
    col_ids = jnp.arange(num_classes, dtype=jnp.int32)
    mask = jnp.any(col_ids[None, :] == clss.astype(jnp.int32)[:, None], axis=0)
    mask = mask.astype(jnp.float32)
    alpha = jnp.asarray(alpha, dtype=jnp.float32)
    beta = jnp.asarray(beta, dtype=jnp.float32)
    scale = 1.0 + mask * (alpha - 1.0)
    offset = mask * beta
    return scale.reshape(1, num_classes), offset.reshape(1, num_classes)


def _round_up(v, m):
    return ((v + m - 1) // m) * m


def _cdiv(a, b):
    return (a + b - 1) // b


def bias_layer_forward(x, scale_row, offset_row):
    """Pallas implementation of BiasLayer.forward.

    x:          [B, C] logits
    scale_row:  [1, C] per-column multiplier (from make_bias_scale_offset)
    offset_row: [1, C] per-column additive bias
    """
    B, C = x.shape
    itemsize = jnp.dtype(x.dtype).itemsize
    # Native packed sublane tile: 8 rows for 32-bit, 16 for 16-bit, 32 for 8-bit.
    sub = max(8, 32 // itemsize)

    # Compute in x.dtype (matches the reference's numerics exactly).
    scale_row = scale_row.astype(x.dtype)
    offset_row = offset_row.astype(x.dtype)

    # --- class-dim tile: lane-dense multiples of 128 when possible, else full C.
    if C % _LANES == 0:
        max_tc = max(_LANES, (_MAX_BLOCK_BYTES // (sub * itemsize)) // _LANES * _LANES)
        tc = min(C, max_tc)
    else:
        # Full-extent class dim (legal: block dim equals full array dim).
        # TODO(synk): for huge non-128-multiple C this can exceed the tile
        # budget; would need an Element/padded path to tile it further.
        tc = C

    # --- batch-dim tile: dtype-aware row bytes, multiple of the native sublane.
    row_bytes = tc * itemsize
    tb = max(sub, (_MAX_BLOCK_BYTES // row_bytes) // sub * sub)
    if B <= tb:
        tb = B  # full-extent batch dim: always legal, no partial block.
    nb = _cdiv(B, tb)
    # Give v7x's two TensorCores work when the batch is big enough.
    if nb < 2 and B >= 2 * sub:
        tb = _round_up(_cdiv(B, 2), sub)
        nb = _cdiv(B, tb)
    nc = _cdiv(C, tc)

    grid = (nb, nc)

    out = pl.pallas_call(
        _bias_kernel,
        out_shape=jax.ShapeDtypeStruct((B, C), x.dtype),
        grid=grid,
        in_specs=[
            pl.BlockSpec((tb, tc), lambda i, j: (i, j)),   # x tile
            pl.BlockSpec((1, tc), lambda i, j: (0, j)),    # scale row
            pl.BlockSpec((1, tc), lambda i, j: (0, j)),    # offset row
        ],
        out_specs=pl.BlockSpec((tb, tc), lambda i, j: (i, j)),
        compiler_params=pltpu.CompilerParams(
            dimension_semantics=("parallel", "parallel"),
            vmem_limit_bytes=_VMEM_LIMIT_BYTES,
        ),
    )(x, scale_row, offset_row)

    return out


def bias_layer_reference(x, clss, alpha, beta):
    """Pure-JAX reference mirroring the PyTorch forward."""
    a = jnp.ones_like(x)
    b = jnp.zeros_like(x)
    a = a.at[:, clss].set(jnp.asarray(alpha, x.dtype))
    b = b.at[:, clss].set(jnp.asarray(beta, x.dtype))
    return a * x + b


if __name__ == "__main__":
    key = jax.random.PRNGKey(0)
    B, C = 4, 16

    x = jax.random.normal(key, (B, C), dtype=jnp.float32)

    # Parameters per module __init__ are alpha=1, beta=0; perturbed here so the
    # corrected class columns are distinguishable in the check below.
    alpha = jnp.float32(1.5)
    beta = jnp.float32(-0.25)

    # Classes handled by this bias layer (the `clss` buffer).
    clss = jnp.array([1, 3, 5, 7], dtype=jnp.int32)

    # Hoisted parameter prep (computed once per task, not per forward).
    scale_row, offset_row = make_bias_scale_offset(clss, C, alpha, beta)

    out = bias_layer_forward(x, scale_row, offset_row)
    out = jax.block_until_ready(out)

    ref = bias_layer_reference(x, clss, alpha, beta)
    assert out.shape == ref.shape, (out.shape, ref.shape)
    assert jnp.allclose(out, ref, atol=1e-6, rtol=1e-6), (out, ref)

    print("KERNEL_OK")
</pallas_src>

<mosaic_0001>
module attributes {stable_mosaic.version = 11 : i64} {
  func.func @_bias_kernel(%arg0: i32, %arg1: i32, %arg2: memref<4x16xf32, #tpu.memory_space<vmem>>, %arg3: memref<1x16xf32, #tpu.memory_space<vmem>>, %arg4: memref<1x16xf32, #tpu.memory_space<vmem>>, %arg5: memref<4x16xf32, #tpu.memory_space<vmem>>) attributes {dimension_semantics = [#tpu.dimension_semantics<parallel>, #tpu.dimension_semantics<parallel>], iteration_bounds = array<i64: 1, 1>, scalar_prefetch = 0 : i64, scratch_operands = 0 : i64, tpu.core_type = #tpu.core_type<tc>, window_params = [{transform_indices = @transform_0, window_bounds = array<i64: 4, 16>}, {transform_indices = @transform_1, window_bounds = array<i64: 1, 16>}, {transform_indices = @transform_2, window_bounds = array<i64: 1, 16>}, {transform_indices = @transform_3, window_bounds = array<i64: 4, 16>}]} {
    %c0 = arith.constant 0 : index
    %c0_0 = arith.constant 0 : index
    %0 = vector.load %arg2[%c0, %c0_0] : memref<4x16xf32, #tpu.memory_space<vmem>>, vector<4x16xf32>
    %c0_1 = arith.constant 0 : index
    %c0_2 = arith.constant 0 : index
    %1 = vector.load %arg3[%c0_1, %c0_2] : memref<1x16xf32, #tpu.memory_space<vmem>>, vector<1x16xf32>
    %2 = vector.broadcast %1 : vector<1x16xf32> to vector<4x16xf32>
    %3 = arith.mulf %0, %2 : vector<4x16xf32>
    %c0_3 = arith.constant 0 : index
    %c0_4 = arith.constant 0 : index
    %4 = vector.load %arg4[%c0_3, %c0_4] : memref<1x16xf32, #tpu.memory_space<vmem>>, vector<1x16xf32>
    %5 = vector.broadcast %4 : vector<1x16xf32> to vector<4x16xf32>
    %6 = arith.addf %3, %5 : vector<4x16xf32>
    %c0_5 = arith.constant 0 : index
    %c0_6 = arith.constant 0 : index
    %7 = vector.load %arg5[%c0_5, %c0_6] : memref<4x16xf32, #tpu.memory_space<vmem>>, vector<4x16xf32>
    tpu.vector_store %arg5[%c0_5, %c0_6], %6 {strides = array<i32>} : memref<4x16xf32, #tpu.memory_space<vmem>>, vector<4x16xf32>,
    return
  }
  func.func @transform_0(%arg0: i32, %arg1: i32) -> (i32, i32) {
    %c0_i32 = arith.constant 0 : i32
    return %arg0, %arg1 : i32, i32
  }
  func.func @transform_1(%arg0: i32, %arg1: i32) -> (i32, i32) {
    %c0_i32 = arith.constant 0 : i32
    %c0_i32_0 = arith.constant 0 : i32
    return %c0_i32, %arg1 : i32, i32
  }
  func.func @transform_2(%arg0: i32, %arg1: i32) -> (i32, i32) {
    %c0_i32 = arith.constant 0 : i32
    %c0_i32_0 = arith.constant 0 : i32
    return %c0_i32, %arg1 : i32, i32
  }
  func.func @transform_3(%arg0: i32, %arg1: i32) -> (i32, i32) {
    %c0_i32 = arith.constant 0 : i32
    return %arg0, %arg1 : i32, i32
  }
}

</mosaic_0001>

<llo_original>
// kernel: tpu_custom_call.1
$region0: #{tpu_custom_call.1}
  #allocation0 [shape = 'u32[]', space=smem, size = 0x4, offset = 0x4, fixed_abs, tag = 'smem constant byte address 0x4 - core index']
  #allocation1 [shape = 'u32[144,128]{1,0:T(1,128)}', space=vmem, size = 0x12000, scoped, tag = 'internal scratch']
  %s0 = inlined_call_operand.hbm [shape: f32[4,16], index: 0, kind: input, shape index: {}]
  %s1 = inlined_call_operand.vmem [shape: f32[1,16], index: 1, kind: input, shape index: {}]
  %s2 = inlined_call_operand.vmem [shape: f32[1,16], index: 2, kind: input, shape index: {}]
  %s3 = inlined_call_operand.hbm [shape: f32[4,16], index: 3, kind: output, shape index: {}]
  %s4 = sld [smem:[#allocation0]]
  $region26: #{tpu_custom_call.1} parent=0
    _
  %s6 = ssub.s32 1, %s4
  %s7 = scalar_select 0, %s6, %s4
  $region1: #{tpu_custom_call.1} parent=0
    #allocation2 [shape = 'u8[2048]{0}', space=vmem, size = 0x800, scoped, tag = 'input window, operand 0, single buffered']
    #allocation3 [shape = 's32[1]{0}', space=sflag, size = 0x4, scoped, tag = 'scoped memory for tpu_custom_call.1']
    #allocation4 [shape = 's32[1]{0}', space=sflag, size = 0x4, scoped, tag = 'scoped memory for tpu_custom_call.1']
    #allocation5 [shape = 'u8[2048]{0}', space=vmem, size = 0x800, scoped, tag = 'output window, operand 0, single buffered']
    %8 = vsyncpa [#allocation3], 0
    %9 = vsyncpa [#allocation4], 0
    // Predicated region
    $region2: #{tpu_custom_call.1} parent=1 // pred_check
      _
    $region3: #{tpu_custom_call.1} parent=1 // pred_check_branch
      %11 = sbr.rel (0) target = $region5
    $region4: #{tpu_custom_call.1} parent=1 // pred_region
      %s13 = ssub.s32 64, 64
      %14 = vsyncadd [#allocation3], %s13
      %s16 = sshll.u32 [#allocation2], 4
      %s17 = int_to_ptr.vmem [resolvable:$true] %s16
      %19 = dma.hbm_to_vmem [thread:$0]  %s0, 64, %s17, [#allocation3]
    $region5: #{tpu_custom_call.1} parent=1 // pred_fallthru
      _
    // Predicated region
    $region6: #{tpu_custom_call.1} parent=1 // pred_check
      _
    $region7: #{tpu_custom_call.1} parent=1 // pred_check_branch
      %21 = sbr.rel (0) target = $region9
    $region8: #{tpu_custom_call.1} parent=1 // pred_region
      _
    $region9: #{tpu_custom_call.1} parent=1 // pred_fallthru
      _
    // Predicated region
    $region10: #{tpu_custom_call.1} parent=1 // pred_check
      _
    $region11: #{tpu_custom_call.1} parent=1 // pred_check_branch
      %23 = sbr.rel (0) target = $region13
    $region12: #{tpu_custom_call.1} parent=1 // pred_region
      _
    $region13: #{tpu_custom_call.1} parent=1 // pred_fallthru
      _
    // Predicated region
    $region14: #{tpu_custom_call.1} parent=1 // pred_check
      _
    $region15: #{tpu_custom_call.1} parent=1 // pred_check_branch
      %25 = sbr.rel (0) target = $region17
    $region16: #{tpu_custom_call.1} parent=1 // pred_region
      %26 = dma.done [#allocation3], 64
    $region17: #{tpu_custom_call.1} parent=1 // pred_fallthru
      _
    %v27 = vld [vmem:[#allocation2] sm:$0xf]
    %v28 = vld [vmem:[%s1] sm:$0x1]
    %v30 = vlaneseq
    %v31 = vshrl.u32 %v30, 7
    %v32 = vsub.s32 0, %v31
    %v33 = vrot.slane %v28, %v32
    %v35 = vmul.f32 %v27, %v33
    %v36 = vld [vmem:[%s2] sm:$0x1]
    %v38 = vlaneseq
    %v39 = vshrl.u32 %v38, 7
    %v40 = vsub.s32 0, %v39
    %v41 = vrot.slane %v36, %v40
    %v43 = vadd.f32 %v35, %v41
    %vm44 = vcmask 125952
    %45 = vst.msk [vmem:[#allocation5] sm:$0xf] %vm44, %v43
    // Predicated region
    $region18: #{tpu_custom_call.1} parent=1 // pred_check
      _
    $region19: #{tpu_custom_call.1} parent=1 // pred_check_branch
      %47 = sbr.rel (0) target = $region21
    $region20: #{tpu_custom_call.1} parent=1 // pred_region
      %s49 = ssub.s32 64, 64
      %50 = vsyncadd [#allocation4], %s49
      %s52 = sshll.u32 [#allocation5], 4
      %s53 = int_to_ptr.vmem [resolvable:$true] %s52
      %55 = dma.vmem_to_hbm [thread:$0]  %s53, 64, %s3, [#allocation4]
    $region21: #{tpu_custom_call.1} parent=1 // pred_fallthru
      _
    // Predicated region
    $region22: #{tpu_custom_call.1} parent=1 // pred_check
      _
    $region23: #{tpu_custom_call.1} parent=1 // pred_check_branch
      %57 = sbr.rel (0) target = $region25
    $region24: #{tpu_custom_call.1} parent=1 // pred_region
      %58 = dma.done [#allocation4], 64
    $region25: #{tpu_custom_call.1} parent=1 // pred_fallthru
      _
    %59 = vsyncpa [#allocation3], 1
    %60 = vsyncpa [#allocation4], 1

</llo_original>
